<compile_context>
chip_gen: v7x
topology: tpu7x:2x2x1
jax: 0.10.0
libtpu: 0.0.40
codegen_flags: <defaults>
</compile_context>

<pallas_src>
import jax
import jax.numpy as jnp
from jax.experimental import pallas as pl
from jax.experimental.pallas import tpu as pltpu

EPS = 1e-4

_BLOCK_BUDGET = 16 << 20      # double-buffered block bytes per grid step
_STEP_IN_TARGET = 4 << 20     # per-step input DMA bytes target/cap
_VMEM_LIMIT = 32 << 20        # scoped VMEM request (ok on v5e/v6e/v7x)


def _ceil_to(v, m):
    return -(-v // m) * m


def _choose_bn(n):
    """Batch rows per grid step and the (possibly padded) batch extent."""
    if n <= 8:
        return n, n                                  # full-extent batch block
    if n % 8 == 0:
        for cand in (32, 16, 8):
            if n % cand == 0:
                return cand, n
    # Awkward batch: pad to a multiple of 8 (one extra HBM copy in the wrapper,
    # but avoids (1, tile) sublane-sparse stores and 8x more grid steps).
    return 8, _ceil_to(n, 8)


def _choose_tile(hw_pad, bn, c, in_itemsize):
    """Largest multiple of 128 dividing hw_pad within VMEM / per-step DMA caps."""
    # Channel (sublane) dim pads to 8 for 4-byte, 16 for 2-byte dtypes in VMEM.
    pad_c = _ceil_to(c, 8 if in_itemsize >= 4 else 16)
    # 3 input buffers + 1 f32 output buffer, double-buffered.
    per_col = 2 * (3 * bn * pad_c * in_itemsize + _ceil_to(bn, 8) * 4)
    cap = _BLOCK_BUDGET // per_col
    cap = min(cap, _STEP_IN_TARGET // max(1, 3 * bn * pad_c * in_itemsize))
    cap = min(hw_pad, max(128, (cap // 128) * 128))
    tile = 128
    t = 128
    while t <= cap:
        if hw_pad % t == 0:
            tile = t
        t += 128
    return tile


def _loss_kernel(loc_ref, scale_ref, tgt_ref, out_ref):
    loc = loc_ref[...].astype(jnp.float32)        # (bn, C, T)
    tgt = tgt_ref[...].astype(jnp.float32)        # (bn, C, T)
    s = scale_ref[...].astype(jnp.float32) + EPS  # (bn, C, T)
    # EUP approx reciprocal + one Newton-Raphson refinement (~f32 accurate; the
    # two extra VALU ops are free in this HBM-bound kernel on all generations).
    r = pl.reciprocal(s, approx=True)
    r = r * (2.0 - s * r)
    diff = loc - tgt
    val = diff * diff * r + jnp.log(s)
    out_ref[...] = jnp.mean(val, axis=1).astype(out_ref.dtype)   # (bn, T)


def variational_l2_loss(loc, target, scale=None):
    """loc: (N, 2C, H, W) if scale is None, else (N, C, H, W). target: (N, C, H, W)."""
    n, c, h, w = target.shape
    hw = h * w
    itemsize = jnp.dtype(loc.dtype).itemsize

    bn, n_pad = _choose_bn(n)
    hw_pad = _ceil_to(hw, 128)
    tile = _choose_tile(hw_pad, bn, c, itemsize)

    def _pad(a):
        pads = [(0, 0)] * a.ndim
        pads[0] = (0, n_pad - a.shape[0])
        pads[-1] = (0, hw_pad - a.shape[-1])
        if any(p != (0, 0) for p in pads):
            a = jnp.pad(a, pads)   # zeros: scale 0 + EPS stays finite in log/recip
        return a

    gn = n_pad // bn
    gj = hw_pad // tile
    # Keep a >= 2-extent leading parallel axis when possible (v7x megacore).
    swap = (gn < 2) and (gj >= 2)
    if swap:
        grid = (gj, gn)
        bidx = lambda a, b: b
        jidx = lambda a, b: a
    else:
        grid = (gn, gj)
        bidx = lambda a, b: a
        jidx = lambda a, b: b

    spec3 = pl.BlockSpec((bn, c, tile), lambda a, b: (bidx(a, b), 0, jidx(a, b)))
    out_spec = pl.BlockSpec((bn, tile), lambda a, b: (bidx(a, b), jidx(a, b)))
    out_shape = jax.ShapeDtypeStruct((n_pad, hw_pad), jnp.float32)
    cparams = pltpu.CompilerParams(
        dimension_semantics=("parallel", "parallel"),
        vmem_limit_bytes=_VMEM_LIMIT)

    tgt_f = _pad(target.reshape(n, c, hw))

    if scale is None:
        assert loc.shape[1] == 2 * c, loc.shape
        # Free contiguous reshape; the loc/scale split is done by the BlockSpec
        # DMA (same array passed twice), not by an in-kernel slice.
        x = _pad(loc.reshape(n, 2, c, hw))
        loc_spec = pl.BlockSpec((bn, None, c, tile),
                                lambda a, b: (bidx(a, b), 0, 0, jidx(a, b)))
        scl_spec = pl.BlockSpec((bn, None, c, tile),
                                lambda a, b: (bidx(a, b), 1, 0, jidx(a, b)))
        out = pl.pallas_call(
            _loss_kernel,
            out_shape=out_shape,
            grid_spec=pltpu.PrefetchScalarGridSpec(
                num_scalar_prefetch=0,
                grid=grid,
                in_specs=[loc_spec, scl_spec, spec3],
                out_specs=out_spec),
            compiler_params=cparams,
        )(x, x, tgt_f)
    else:
        loc_f = _pad(loc.reshape(n, c, hw))
        scl_f = _pad(scale.reshape(n, c, hw))
        out = pl.pallas_call(
            _loss_kernel,
            out_shape=out_shape,
            grid_spec=pltpu.PrefetchScalarGridSpec(
                num_scalar_prefetch=0,
                grid=grid,
                in_specs=[spec3, spec3, spec3],
                out_specs=out_spec),
            compiler_params=cparams,
        )(loc_f, scl_f, tgt_f)

    return out[:n, :hw].reshape(n, h, w)


def _reference(loc, target, scale=None):
    if scale is None:
        c = loc.shape[1] // 2
        loc, scale = loc[:, :c], loc[:, c:]
    return jnp.mean((loc - target) ** 2 / (scale + EPS) + jnp.log(scale + EPS), axis=1)


if __name__ == "__main__":
    key = jax.random.PRNGKey(0)
    k1, k2, k3 = jax.random.split(key, 3)

    N, C, H, W = 2, 4, 16, 16
    loc_part = jax.random.normal(k1, (N, C, H, W), dtype=jnp.float32)
    scale_part = jax.nn.softplus(
        jax.random.normal(k2, (N, C, H, W), dtype=jnp.float32)) + 0.1
    loc_full = jnp.concatenate([loc_part, scale_part], axis=1)   # (N, 2C, H, W)
    target = jax.random.normal(k3, (N, C, H, W), dtype=jnp.float32)

    ref = _reference(loc_full, target)

    # Combined path (scale packed into loc's channel dim).
    out = jax.block_until_ready(variational_l2_loss(loc_full, target))
    assert out.shape == (N, H, W), out.shape
    assert jnp.allclose(out, ref, atol=1e-4, rtol=1e-4), \
        float(jnp.max(jnp.abs(out - ref)))

    # Explicit-scale path.
    out_sep = jax.block_until_ready(
        variational_l2_loss(loc_part, target, scale=scale_part))
    assert out_sep.shape == (N, H, W), out_sep.shape
    assert jnp.allclose(out_sep, ref, atol=1e-4, rtol=1e-4), \
        float(jnp.max(jnp.abs(out_sep - ref)))

    print("KERNEL_OK")
</pallas_src>

<mosaic_0001>
module attributes {stable_mosaic.version = 11 : i64} {
  func.func @_loss_kernel(%arg0: i32, %arg1: i32, %arg2: memref<2x1x4x256xf32, #tpu.memory_space<vmem>>, %arg3: memref<2x1x4x256xf32, #tpu.memory_space<vmem>>, %arg4: memref<2x4x256xf32, #tpu.memory_space<vmem>>, %arg5: memref<2x256xf32, #tpu.memory_space<vmem>>) attributes {dimension_semantics = [#tpu.dimension_semantics<parallel>, #tpu.dimension_semantics<parallel>], iteration_bounds = array<i64: 1, 1>, scalar_prefetch = 0 : i64, scratch_operands = 0 : i64, tpu.core_type = #tpu.core_type<tc>, window_params = [{transform_indices = @transform_0, window_bounds = array<i64: 2, 1, 4, 256>}, {transform_indices = @transform_1, window_bounds = array<i64: 2, 1, 4, 256>}, {transform_indices = @transform_2, window_bounds = array<i64: 2, 4, 256>}, {transform_indices = @transform_3, window_bounds = array<i64: 2, 256>}]} {
    %c0 = arith.constant 0 : index
    %c0_0 = arith.constant 0 : index
    %c0_1 = arith.constant 0 : index
    %c0_2 = arith.constant 0 : index
    %0 = vector.load %arg2[%c0, %c0_0, %c0_1, %c0_2] : memref<2x1x4x256xf32, #tpu.memory_space<vmem>>, vector<2x1x4x256xf32>
    %1 = vector.shape_cast %0 : vector<2x1x4x256xf32> to vector<2x4x256xf32>
    %c0_3 = arith.constant 0 : index
    %c0_4 = arith.constant 0 : index
    %c0_5 = arith.constant 0 : index
    %2 = vector.load %arg4[%c0_3, %c0_4, %c0_5] : memref<2x4x256xf32, #tpu.memory_space<vmem>>, vector<2x4x256xf32>
    %c0_6 = arith.constant 0 : index
    %c0_7 = arith.constant 0 : index
    %c0_8 = arith.constant 0 : index
    %c0_9 = arith.constant 0 : index
    %3 = vector.load %arg3[%c0_6, %c0_7, %c0_8, %c0_9] : memref<2x1x4x256xf32, #tpu.memory_space<vmem>>, vector<2x1x4x256xf32>
    %4 = vector.shape_cast %3 : vector<2x1x4x256xf32> to vector<2x4x256xf32>
    %cst = arith.constant 9.99999974E-5 : f32
    %5 = vector.broadcast %cst : f32 to vector<2x4x256xf32>
    %6 = arith.addf %4, %5 : vector<2x4x256xf32>
    %7 = tpu.reciprocal %6 {approx = true} : vector<2x4x256xf32> -> vector<2x4x256xf32>
    %8 = arith.mulf %6, %7 : vector<2x4x256xf32>
    %cst_10 = arith.constant 2.000000e+00 : f32
    %9 = vector.broadcast %cst_10 : f32 to vector<2x4x256xf32>
    %10 = arith.subf %9, %8 : vector<2x4x256xf32>
    %11 = arith.mulf %7, %10 : vector<2x4x256xf32>
    %12 = arith.subf %1, %2 : vector<2x4x256xf32>
    %13 = arith.mulf %12, %12 : vector<2x4x256xf32>
    %14 = arith.mulf %13, %11 : vector<2x4x256xf32>
    %15 = math.log %6 : vector<2x4x256xf32>
    %16 = arith.addf %14, %15 : vector<2x4x256xf32>
    %cst_11 = arith.constant dense<0.000000e+00> : vector<2x256xf32>
    %17 = vector.multi_reduction <add>, %16, %cst_11 [1] : vector<2x4x256xf32> to vector<2x256xf32>
    %cst_12 = arith.constant 4.000000e+00 : f32
    %18 = vector.broadcast %cst_12 : f32 to vector<2x256xf32>
    %19 = arith.divf %17, %18 : vector<2x256xf32>
    %c0_13 = arith.constant 0 : index
    %c0_14 = arith.constant 0 : index
    %20 = vector.load %arg5[%c0_13, %c0_14] : memref<2x256xf32, #tpu.memory_space<vmem>>, vector<2x256xf32>
    tpu.vector_store %arg5[%c0_13, %c0_14], %19 {strides = array<i32>} : memref<2x256xf32, #tpu.memory_space<vmem>>, vector<2x256xf32>,
    return
  }
  func.func @transform_0(%arg0: i32, %arg1: i32) -> (i32, i32, i32, i32) {
    %c0_i32 = arith.constant 0 : i32
    %c0_i32_0 = arith.constant 0 : i32
    %c0_i32_1 = arith.constant 0 : i32
    return %arg0, %c0_i32, %c0_i32_0, %arg1 : i32, i32, i32, i32
  }
  func.func @transform_1(%arg0: i32, %arg1: i32) -> (i32, i32, i32, i32) {
    %c1_i32 = arith.constant 1 : i32
    %c0_i32 = arith.constant 0 : i32
    %c0_i32_0 = arith.constant 0 : i32
    return %arg0, %c1_i32, %c0_i32, %arg1 : i32, i32, i32, i32
  }
  func.func @transform_2(%arg0: i32, %arg1: i32) -> (i32, i32, i32) {
    %c0_i32 = arith.constant 0 : i32
    %c0_i32_0 = arith.constant 0 : i32
    return %arg0, %c0_i32, %arg1 : i32, i32, i32
  }
  func.func @transform_3(%arg0: i32, %arg1: i32) -> (i32, i32) {
    %c0_i32 = arith.constant 0 : i32
    return %arg0, %arg1 : i32, i32
  }
}

</mosaic_0001>

<llo_original>
// kernel: tpu_custom_call.1
$region0: #{tpu_custom_call.1}
  #allocation0 [shape = 'u32[]', space=smem, size = 0x4, offset = 0x4, fixed_abs, tag = 'smem constant byte address 0x4 - core index']
  #allocation1 [shape = 'u32[144,128]{1,0:T(1,128)}', space=vmem, size = 0x12000, scoped, tag = 'internal scratch']
  %s0 = inlined_call_operand.hbm [shape: f32[2,2,4,256], index: 0, kind: input, shape index: {}]
  %s1 = inlined_call_operand.hbm [shape: f32[2,2,4,256], index: 1, kind: input, shape index: {}]
  %s2 = inlined_call_operand.hbm [shape: f32[2,4,256], index: 2, kind: input, shape index: {}]
  %s3 = inlined_call_operand.hbm [shape: f32[2,256], index: 3, kind: output, shape index: {}]
  %s4 = sld [smem:[#allocation0]]
  $region34: #{tpu_custom_call.1} parent=0
    _
  %s6 = ssub.s32 1, %s4
  %s7 = scalar_select 0, %s6, %s4
  $region1: #{tpu_custom_call.1} parent=0
    #allocation2 [shape = 'u8[8192]{0}', space=vmem, size = 0x2000, scoped, tag = 'input window, operand 0, single buffered']
    #allocation3 [shape = 's32[1]{0}', space=sflag, size = 0x4, scoped, tag = 'scoped memory for tpu_custom_call.1']
    #allocation4 [shape = 's32[1]{0}', space=sflag, size = 0x4, scoped, tag = 'scoped memory for tpu_custom_call.1']
    #allocation5 [shape = 'u8[8192]{0}', space=vmem, size = 0x2000, scoped, tag = 'input window, operand 1, single buffered']
    #allocation6 [shape = 's32[1]{0}', space=sflag, size = 0x4, scoped, tag = 'scoped memory for tpu_custom_call.1']
    #allocation7 [shape = 'u8[8192]{0}', space=vmem, size = 0x2000, scoped, tag = 'input window, operand 2, single buffered']
    #allocation8 [shape = 'u8[2048]{0}', space=vmem, size = 0x800, scoped, tag = 'output window, operand 0, single buffered']
    %8 = vsyncpa [#allocation3], 0
    %9 = vsyncpa [#allocation6], 0
    %10 = vsyncpa [#allocation4], 0
    // Predicated region
    $region2: #{tpu_custom_call.1} parent=1 // pred_check
      _
    $region3: #{tpu_custom_call.1} parent=1 // pred_check_branch
      %12 = sbr.rel (0) target = $region5
    $region4: #{tpu_custom_call.1} parent=1 // pred_region
      %s14 = ssub.s32 256, 256
      %15 = vsyncadd [#allocation3], %s14
      %s16 = sshll.u32 [#allocation2], 4
      %s17 = int_to_ptr.vmem [resolvable:$true] %s16
      %22 = dma.hbm_to_vmem [thread:$0]  %s0, 256, %s17, [#allocation3], 256, 128, 8
    $region5: #{tpu_custom_call.1} parent=1 // pred_fallthru
      _
    // Predicated region
    $region6: #{tpu_custom_call.1} parent=1 // pred_check
      _
    $region7: #{tpu_custom_call.1} parent=1 // pred_check_branch
      %24 = sbr.rel (0) target = $region9
    $region8: #{tpu_custom_call.1} parent=1 // pred_region
      %s26 = ssub.s32 256, 256
      %27 = vsyncadd [#allocation6], %s26
      %s28 = scalar_lea.hbm %s1, 128
      %s29 = sshll.u32 [#allocation5], 4
      %s30 = int_to_ptr.vmem [resolvable:$true] %s29
      %35 = dma.hbm_to_vmem [thread:$0]  %s28, 256, %s30, [#allocation6], 256, 128, 8
    $region9: #{tpu_custom_call.1} parent=1 // pred_fallthru
      _
    // Predicated region
    $region10: #{tpu_custom_call.1} parent=1 // pred_check
      _
    $region11: #{tpu_custom_call.1} parent=1 // pred_check_branch
      %37 = sbr.rel (0) target = $region13
    $region12: #{tpu_custom_call.1} parent=1 // pred_region
      %s39 = ssub.s32 256, 256
      %40 = vsyncadd [#allocation6], %s39
      %s41 = sshll.u32 [#allocation7], 4
      %s42 = int_to_ptr.vmem [resolvable:$true] %s41
      %47 = dma.hbm_to_vmem [thread:$0]  %s2, 256, %s42, [#allocation6], 128, 128, 8
    $region13: #{tpu_custom_call.1} parent=1 // pred_fallthru
      _
    // Predicated region
    $region14: #{tpu_custom_call.1} parent=1 // pred_check
      _
    $region15: #{tpu_custom_call.1} parent=1 // pred_check_branch
      %49 = sbr.rel (0) target = $region17
    $region16: #{tpu_custom_call.1} parent=1 // pred_region
      %50 = dma.done [#allocation3], 256
    $region17: #{tpu_custom_call.1} parent=1 // pred_fallthru
      _
    // Predicated region
    $region18: #{tpu_custom_call.1} parent=1 // pred_check
      _
    $region19: #{tpu_custom_call.1} parent=1 // pred_check_branch
      %52 = sbr.rel (0) target = $region21
    $region20: #{tpu_custom_call.1} parent=1 // pred_region
      %53 = dma.done [#allocation6], 256
    $region21: #{tpu_custom_call.1} parent=1 // pred_fallthru
      _
    // Predicated region
    $region22: #{tpu_custom_call.1} parent=1 // pred_check
      _
    $region23: #{tpu_custom_call.1} parent=1 // pred_check_branch
      %55 = sbr.rel (0) target = $region25
    $region24: #{tpu_custom_call.1} parent=1 // pred_region
      %56 = dma.done [#allocation6], 256
    $region25: #{tpu_custom_call.1} parent=1 // pred_fallthru
      _
    %v57 = vld [vmem:[#allocation2] sm:$0xff]
    %v58 = vld [vmem:[#allocation2 + $0x8] sm:$0xff]
    %v59 = vld [vmem:[#allocation7] sm:$0xff]
    %v60 = vld [vmem:[#allocation7 + $0x8] sm:$0xff]
    %v61 = vld [vmem:[#allocation5] sm:$0xff]
    %v62 = vld [vmem:[#allocation5 + $0x8] sm:$0xff]
    %v63 = vadd.f32 %v61, 0.0001
    %v64 = vadd.f32 %v62, 0.0001
    %v65 = vrcp.pop %v63
    %v66 = vrcp.pop %v64
    %v67 = vmul.f32 %v63, %v65
    %v68 = vmul.f32 %v64, %v66
    %v69 = vsub.f32 2.0, %v67
    %v70 = vsub.f32 2.0, %v68
    %v71 = vmul.f32 %v65, %v69
    %v72 = vmul.f32 %v66, %v70
    %v73 = vsub.f32 %v57, %v59
    %v74 = vsub.f32 %v58, %v60
    %v75 = vmul.f32 %v73, %v73
    %v76 = vmul.f32 %v74, %v74
    %v77 = vmul.f32 %v75, %v71
    %v78 = vmul.f32 %v76, %v72
    %v79 = vlog2.pop %v63
    %v80 = vmul.f32 %v79, 0.6931472
    %v81 = vlog2.pop %v64
    %v82 = vmul.f32 %v81, 0.6931472
    %v83 = vadd.f32 %v77, %v80
    %v84 = vadd.f32 %v78, %v82
    %v87 = vcombine.high %v83, %v83
    %v88 = vcombine.high %v84, %v84
    %vm91 = vcmask 1043456
    %v92 = vsel %vm91, %v83, 0.0
    %v93 = vrot.slane %v92, 4
    %v94 = vadd.f32 %v92, %v93
    %v95 = vrot.slane %v94, 2
    %v96 = vadd.f32 %v94, %v95
    %v97 = vrot.slane %v96, 1
    %v98 = vadd.f32 %v96, %v97
    %v99 = vsel %vm91, %v87, 0.0
    %v100 = vrot.slane %v99, 4
    %v101 = vadd.f32 %v99, %v100
    %v102 = vrot.slane %v101, 2
    %v103 = vadd.f32 %v101, %v102
    %v104 = vrot.slane %v103, 1
    %v105 = vadd.f32 %v103, %v104
    %v106 = vsel %vm91, %v84, 0.0
    %v107 = vrot.slane %v106, 4
    %v108 = vadd.f32 %v106, %v107
    %v109 = vrot.slane %v108, 2
    %v110 = vadd.f32 %v108, %v109
    %v111 = vrot.slane %v110, 1
    %v112 = vadd.f32 %v110, %v111
    %v113 = vsel %vm91, %v88, 0.0
    %v114 = vrot.slane %v113, 4
    %v115 = vadd.f32 %v113, %v114
    %v116 = vrot.slane %v115, 2
    %v117 = vadd.f32 %v115, %v116
    %v118 = vrot.slane %v117, 1
    %v119 = vadd.f32 %v117, %v118
    %v120 = vrcp.pop 4.0
    %v121 = vmul.f32 %v98, %v120
    %v122 = vmul.f32 %v105, %v120
    %v123 = vmul.f32 %v112, %v120
    %v124 = vmul.f32 %v119, %v120
    %v129 = vcombine.low %v121, %v122
    %v131 = vunpack.c.l.s4 1983009808
    %v132 = vunpack.c.0.s8 %v131
    %v133 = vlaneseq
    %v134 = vshrl.u32 %v133, 7
    %v135 = vsub.s32 %v132, %v134
    %v136 = vrot.slane %v129, %v135
    %v137 = vcombine.low %v123, %v124
    %v139 = vunpack.c.l.s4 1983009808
    %v140 = vunpack.c.0.s8 %v139
    %v141 = vlaneseq
    %v142 = vshrl.u32 %v141, 7
    %v143 = vsub.s32 %v140, %v142
    %v144 = vrot.slane %v137, %v143
    %vm145 = vcmask 1044484
    %v146 = vsel %vm145, %v136, %v136
    %vm147 = vcmask 1046534
    %v148 = vsel %vm147, %v136, %v146
    %v149 = vrot.slane %v144, 7
    %vm150 = vcmask 1041409
    %v151 = vsel %vm150, %v149, %v148
    %vm152 = vcmask 1043459
    %v153 = vsel %vm152, %v149, %v151
    %vm154 = vcmask 1045509
    %v155 = vsel %vm154, %v149, %v153
    %vm156 = vcmask 1047559
    %v157 = vsel %vm156, %v149, %v155
    %159 = vst [vmem:[#allocation8] sm:$0xf] %v157
    // Predicated region
    $region26: #{tpu_custom_call.1} parent=1 // pred_check
      _
    $region27: #{tpu_custom_call.1} parent=1 // pred_check_branch
      %161 = sbr.rel (0) target = $region29
    $region28: #{tpu_custom_call.1} parent=1 // pred_region
      %s163 = ssub.s32 64, 64
      %164 = vsyncadd [#allocation4], %s163
      %s166 = sshll.u32 [#allocation8], 4
      %s167 = int_to_ptr.vmem [resolvable:$true] %s166
      %169 = dma.vmem_to_hbm [thread:$0]  %s167, 64, %s3, [#allocation4]
    $region29: #{tpu_custom_call.1} parent=1 // pred_fallthru
      _
    // Predicated region
    $region30: #{tpu_custom_call.1} parent=1 // pred_check
      _
    $region31: #{tpu_custom_call.1} parent=1 // pred_check_branch
      %171 = sbr.rel (0) target = $region33
    $region32: #{tpu_custom_call.1} parent=1 // pred_region
      %172 = dma.done [#allocation4], 64
    $region33: #{tpu_custom_call.1} parent=1 // pred_fallthru
      _
    %173 = vsyncpa [#allocation3], 1
    %174 = vsyncpa [#allocation6], 1
    %175 = vsyncpa [#allocation4], 1

</llo_original>
